<compile_context>
chip_gen: v6e
topology: v6e:2x2x1
jax: 0.10.0
libtpu: 0.0.40
codegen_flags: <defaults>
</compile_context>

<pallas_src>
import math
import functools

import jax
import jax.numpy as jnp
from jax import lax
from jax.experimental import pallas as pl
from jax.experimental.pallas import tpu as pltpu


# ----------------------------- parameter setup -----------------------------
def make_pe_table(max_len: int, d_model: int, dtype=jnp.float32) -> jnp.ndarray:
    """Replicates the buffer built in PositionalEncoding.__init__ (shape (max_len, d_model))."""
    position = jnp.arange(0, max_len, dtype=jnp.float32)[:, None]            # (max_len, 1)
    div_term = jnp.exp(
        jnp.arange(0, d_model, 2, dtype=jnp.float32) * (-math.log(10000.0) / d_model)
    )                                                                        # (d_model//2,)
    angles = position * div_term                                             # (max_len, d_model//2)
    pe = jnp.zeros((max_len, d_model), dtype=jnp.float32)
    pe = pe.at[:, 0::2].set(jnp.sin(angles))
    pe = pe.at[:, 1::2].set(jnp.cos(angles))
    return pe.astype(dtype)


# ------------------------------- tile sizing --------------------------------
_TARGET_BLOCK_BYTES = 2 * 1024 * 1024   # ~2 MiB blocks amortize per-step overhead
_VMEM_LIMIT_BYTES = 32 * 1024 * 1024    # safe scoped-VMEM cap on v5e/v6e/v7x


def _pick_tile(total: int, align: int, target: int) -> int:
    """Largest multiple of `align` that divides `total` and is <= target.
    Falls back to the full extent when `total` is small or not align-divisible."""
    if total <= target or total % align != 0:
        return total
    best = align
    t = align
    while t <= target:
        if total % t == 0:
            best = t
        t += align
    return best


def _choose_tiles(batch: int, lanes: int, itemsize: int):
    # Lane tile: multiple of 128 (unmasked vector loads/stores), sized to ~2 MiB.
    tl = _pick_tile(lanes, 128, max(512, _TARGET_BLOCK_BYTES // itemsize))
    # Batch (sublane) tile: multiple of 8, or the full extent if batch % 8 != 0.
    if batch % 8 != 0:
        tb = batch
    else:
        tb = _pick_tile(batch, 8, max(8, _TARGET_BLOCK_BYTES // (tl * itemsize)))
    return tb, tl


# -------------------------------- kernels ----------------------------------
def pe_add_kernel(x_ref, pe_ref, o_ref):
    # x_ref: (TB, TL) slab; pe_ref: (1, TL) -> broadcast add over batch rows.
    # Dropout in eval mode is identity.
    o_ref[...] = x_ref[...] + pe_ref[...]


def pe_add_dropout_kernel(x_ref, pe_ref, bits_ref, o_ref, *, threshold: int, scale: float):
    # Training-mode dropout: keep with prob (1 - p), scale kept values by 1/(1-p).
    # bits_ref holds uniformly random int32 bit patterns; integer-threshold compare.
    y = x_ref[...] + pe_ref[...]
    keep = bits_ref[...] >= jnp.int32(threshold)
    o_ref[...] = jnp.where(keep, y * scale, jnp.zeros_like(y)).astype(o_ref.dtype)


# -------------------------------- wrapper -----------------------------------
def positional_encoding(x, pe_table, *, dropout_p=0.1, training=False, seed=0):
    """Forward of PositionalEncoding: x + pe[:, :S]; dropout applied if training."""
    B, S, D = x.shape
    L = S * D

    # Lane-dense layout: flatten (S, D) into one >=128-wide last dim.
    pe_s = pe_table[:S].astype(x.dtype).reshape(1, L)
    x2 = x.reshape(B, L)

    itemsize = jnp.dtype(x.dtype).itemsize
    tb, tl = _choose_tiles(B, L, itemsize)
    # Grid order: lane tiles OUTER, batch tiles INNER -> pe block index is
    # constant across the inner axis (no re-DMA of the PE tile per batch tile).
    grid = (L // tl, B // tb)

    x_spec = pl.BlockSpec((tb, tl), lambda j, i: (i, j))
    pe_spec = pl.BlockSpec((1, tl), lambda j, i: (0, j))
    bits_spec = pl.BlockSpec((tb, tl), lambda j, i: (i, j))
    out_spec = pl.BlockSpec((tb, tl), lambda j, i: (i, j))
    out_shape = jax.ShapeDtypeStruct((B, L), x.dtype)

    compiler_params = pltpu.CompilerParams(
        dimension_semantics=("parallel", "parallel"),
        vmem_limit_bytes=_VMEM_LIMIT_BYTES,
    )

    if (not training) or dropout_p == 0.0:
        out2 = pl.pallas_call(
            pe_add_kernel,
            out_shape=out_shape,
            grid=grid,
            in_specs=[x_spec, pe_spec],
            out_specs=out_spec,
            compiler_params=compiler_params,
        )(x2, pe_s)
        return out2.reshape(B, S, D)

    # Training mode. Random bit patterns come from the standard JAX PRNG in the
    # wrapper so this path runs on TPU and under the interpreter alike.
    # TODO(synk): on real TPU, pltpu.prng_seed/prng_random_bits inside the kernel
    # would avoid streaming the mask from HBM, but it does not lower off-TPU.
    rng = jax.random.PRNGKey(seed)
    bits = lax.bitcast_convert_type(
        jax.random.bits(rng, (B, L), dtype=jnp.uint32), jnp.int32
    )
    # bits is uniform over the full int32 range [-2^31, 2^31).
    # keep iff bits >= threshold  =>  P(keep) = (2^31 - threshold) / 2^32 = 1 - p.
    threshold = int(round(float(dropout_p) * (1 << 32))) - (1 << 31)
    threshold = max(-(1 << 31), min(threshold, (1 << 31) - 1))
    scale = 1.0 / (1.0 - float(dropout_p))

    kernel = functools.partial(pe_add_dropout_kernel, threshold=threshold, scale=scale)
    out2 = pl.pallas_call(
        kernel,
        out_shape=out_shape,
        grid=grid,
        in_specs=[x_spec, pe_spec, bits_spec],
        out_specs=out_spec,
        compiler_params=compiler_params,
    )(x2, pe_s, bits)
    return out2.reshape(B, S, D)


# ---------------------------------- main ------------------------------------
if __name__ == "__main__":
    B, S, D = 2, 8, 32
    max_len = 64
    dropout_p = 0.1

    key = jax.random.PRNGKey(0)
    x = jax.random.normal(key, (B, S, D), dtype=jnp.float32)

    pe_table = make_pe_table(max_len, D, dtype=jnp.float32)

    # Eval-mode forward (dropout identity) -- matches PyTorch .eval() exactly.
    out_eval = jax.block_until_ready(
        positional_encoding(x, pe_table, dropout_p=dropout_p, training=False)
    )
    ref = x + pe_table[:S][None]
    assert out_eval.shape == (B, S, D)
    assert jnp.allclose(out_eval, ref, atol=1e-6, rtol=1e-6), "eval-mode mismatch"

    # Training-mode forward: the mask is random, so check that every element is
    # either 0 (dropped) or (x + pe) / (1 - p) (kept and rescaled).
    out_train = jax.block_until_ready(
        positional_encoding(x, pe_table, dropout_p=dropout_p, training=True, seed=123)
    )
    assert out_train.shape == (B, S, D)
    assert out_train.dtype == x.dtype
    kept_ref = ref / (1.0 - dropout_p)
    elementwise_ok = jnp.where(
        out_train == 0, True, jnp.isclose(out_train, kept_ref, atol=1e-5, rtol=1e-5)
    )
    assert bool(jnp.all(elementwise_ok)), "training-mode mismatch"

    print("KERNEL_OK")
</pallas_src>

<mosaic_0001>
module attributes {stable_mosaic.version = 11 : i64} {
  func.func @pe_add_kernel(%arg0: i32, %arg1: i32, %arg2: memref<2x256xf32, #tpu.memory_space<vmem>>, %arg3: memref<1x256xf32, #tpu.memory_space<vmem>>, %arg4: memref<2x256xf32, #tpu.memory_space<vmem>>) attributes {dimension_semantics = [#tpu.dimension_semantics<parallel>, #tpu.dimension_semantics<parallel>], iteration_bounds = array<i64: 1, 1>, scalar_prefetch = 0 : i64, scratch_operands = 0 : i64, tpu.core_type = #tpu.core_type<tc>, window_params = [{transform_indices = @transform_0, window_bounds = array<i64: 2, 256>}, {transform_indices = @transform_1, window_bounds = array<i64: 1, 256>}, {transform_indices = @transform_2, window_bounds = array<i64: 2, 256>}]} {
    %c0 = arith.constant 0 : index
    %c0_0 = arith.constant 0 : index
    %0 = vector.load %arg2[%c0, %c0_0] : memref<2x256xf32, #tpu.memory_space<vmem>>, vector<2x256xf32>
    %c0_1 = arith.constant 0 : index
    %c0_2 = arith.constant 0 : index
    %1 = vector.load %arg3[%c0_1, %c0_2] : memref<1x256xf32, #tpu.memory_space<vmem>>, vector<1x256xf32>
    %2 = vector.broadcast %1 : vector<1x256xf32> to vector<2x256xf32>
    %3 = arith.addf %0, %2 : vector<2x256xf32>
    %c0_3 = arith.constant 0 : index
    %c0_4 = arith.constant 0 : index
    %4 = vector.load %arg4[%c0_3, %c0_4] : memref<2x256xf32, #tpu.memory_space<vmem>>, vector<2x256xf32>
    tpu.vector_store %arg4[%c0_3, %c0_4], %3 {strides = array<i32>} : memref<2x256xf32, #tpu.memory_space<vmem>>, vector<2x256xf32>,
    return
  }
  func.func @transform_0(%arg0: i32, %arg1: i32) -> (i32, i32) {
    %c0_i32 = arith.constant 0 : i32
    return %arg1, %arg0 : i32, i32
  }
  func.func @transform_1(%arg0: i32, %arg1: i32) -> (i32, i32) {
    %c0_i32 = arith.constant 0 : i32
    %c0_i32_0 = arith.constant 0 : i32
    return %c0_i32, %arg0 : i32, i32
  }
  func.func @transform_2(%arg0: i32, %arg1: i32) -> (i32, i32) {
    %c0_i32 = arith.constant 0 : i32
    return %arg1, %arg0 : i32, i32
  }
}

</mosaic_0001>

<llo_original>
// kernel: tpu_custom_call.1
$region0: #{tpu_custom_call.1}
  #allocation0 [shape = 'u32[]', space=smem, size = 0x4, offset = 0x4, fixed_abs, tag = 'smem constant byte address 0x4 - core index']
  #allocation1 [shape = 'u32[144,128]{1,0:T(1,128)}', space=vmem, size = 0x12000, scoped, tag = 'internal scratch']
  %s0 = inlined_call_operand.hbm [shape: f32[2,256], index: 0, kind: input, shape index: {}]
  %s1 = inlined_call_operand.hbm [shape: f32[1,256], index: 1, kind: input, shape index: {}]
  %s2 = inlined_call_operand.hbm [shape: f32[2,256], index: 2, kind: output, shape index: {}]
  %s3 = sld [smem:[#allocation0]]
  $region26: #{tpu_custom_call.1} parent=0
    _
  %s5 = ssub.s32 1, %s3
  %s6 = scalar_select 0, %s5, %s3
  $region1: #{tpu_custom_call.1} parent=0
    #allocation2 [shape = 'u8[2048]{0}', space=vmem, size = 0x800, scoped, tag = 'input window, operand 0, single buffered']
    #allocation3 [shape = 's32[1]{0}', space=sflag, size = 0x4, scoped, tag = 'scoped memory for tpu_custom_call.1']
    #allocation4 [shape = 's32[1]{0}', space=sflag, size = 0x4, scoped, tag = 'scoped memory for tpu_custom_call.1']
    #allocation5 [shape = 'u8[1024]{0}', space=vmem, size = 0x400, scoped, tag = 'input window, operand 1, single buffered']
    #allocation6 [shape = 's32[1]{0}', space=sflag, size = 0x4, scoped, tag = 'scoped memory for tpu_custom_call.1']
    #allocation7 [shape = 'u8[2048]{0}', space=vmem, size = 0x800, scoped, tag = 'output window, operand 0, single buffered']
    %7 = vsyncpa [#allocation3], 0
    %8 = vsyncpa [#allocation6], 0
    %9 = vsyncpa [#allocation4], 0
    // Predicated region
    $region2: #{tpu_custom_call.1} parent=1 // pred_check
      _
    $region3: #{tpu_custom_call.1} parent=1 // pred_check_branch
      %11 = sbr.rel (0) target = $region5
    $region4: #{tpu_custom_call.1} parent=1 // pred_region
      %s13 = ssub.s32 64, 64
      %14 = vsyncadd [#allocation3], %s13
      %s16 = sshll.u32 [#allocation2], 4
      %s17 = int_to_ptr.vmem [resolvable:$true] %s16
      %19 = dma.hbm_to_vmem [thread:$0]  %s0, 64, %s17, [#allocation3]
    $region5: #{tpu_custom_call.1} parent=1 // pred_fallthru
      _
    // Predicated region
    $region6: #{tpu_custom_call.1} parent=1 // pred_check
      _
    $region7: #{tpu_custom_call.1} parent=1 // pred_check_branch
      %21 = sbr.rel (0) target = $region9
    $region8: #{tpu_custom_call.1} parent=1 // pred_region
      %s23 = ssub.s32 32, 32
      %24 = vsyncadd [#allocation6], %s23
      %s26 = sshll.u32 [#allocation5], 4
      %s27 = int_to_ptr.vmem [resolvable:$true] %s26
      %29 = dma.hbm_to_vmem [thread:$0]  %s1, 32, %s27, [#allocation6]
    $region9: #{tpu_custom_call.1} parent=1 // pred_fallthru
      _
    // Predicated region
    $region10: #{tpu_custom_call.1} parent=1 // pred_check
      _
    $region11: #{tpu_custom_call.1} parent=1 // pred_check_branch
      %31 = sbr.rel (0) target = $region13
    $region12: #{tpu_custom_call.1} parent=1 // pred_region
      %32 = dma.done [#allocation3], 64
    $region13: #{tpu_custom_call.1} parent=1 // pred_fallthru
      _
    // Predicated region
    $region14: #{tpu_custom_call.1} parent=1 // pred_check
      _
    $region15: #{tpu_custom_call.1} parent=1 // pred_check_branch
      %34 = sbr.rel (0) target = $region17
    $region16: #{tpu_custom_call.1} parent=1 // pred_region
      %35 = dma.done [#allocation6], 32
    $region17: #{tpu_custom_call.1} parent=1 // pred_fallthru
      _
    %v36 = vld [vmem:[#allocation2] sm:$0xf]
    %v37 = vld [vmem:[#allocation5] sm:$0x3]
    %v39 = vlaneseq
    %v40 = vshrl.u32 %v39, 7
    %v41 = vsub.s32 0, %v40
    %v42 = vrot.slane %v37, %v41
    %v43 = vlaneseq
    %v44 = vshrl.u32 %v43, 7
    %v45 = vsub.s32 1, %v44
    %v46 = vrot.slane %v37, %v45
    %v47 = vcombine.low %v42, %v46
    %v49 = vunpack.c.l.s4 1983009808
    %v50 = vunpack.c.0.s8 %v49
    %v51 = vlaneseq
    %v52 = vshrl.u32 %v51, 7
    %v53 = vsub.s32 %v50, %v52
    %v54 = vrot.slane %v47, %v53
    %v56 = vadd.f32 %v36, %v54
    %57 = vst [vmem:[#allocation7] sm:$0xf] %v56
    // Predicated region
    $region18: #{tpu_custom_call.1} parent=1 // pred_check
      _
    $region19: #{tpu_custom_call.1} parent=1 // pred_check_branch
      %59 = sbr.rel (0) target = $region21
    $region20: #{tpu_custom_call.1} parent=1 // pred_region
      %s61 = ssub.s32 64, 64
      %62 = vsyncadd [#allocation4], %s61
      %s64 = sshll.u32 [#allocation7], 4
      %s65 = int_to_ptr.vmem [resolvable:$true] %s64
      %67 = dma.vmem_to_hbm [thread:$0]  %s65, 64, %s2, [#allocation4]
    $region21: #{tpu_custom_call.1} parent=1 // pred_fallthru
      _
    // Predicated region
    $region22: #{tpu_custom_call.1} parent=1 // pred_check
      _
    $region23: #{tpu_custom_call.1} parent=1 // pred_check_branch
      %69 = sbr.rel (0) target = $region25
    $region24: #{tpu_custom_call.1} parent=1 // pred_region
      %70 = dma.done [#allocation4], 64
    $region25: #{tpu_custom_call.1} parent=1 // pred_fallthru
      _
    %71 = vsyncpa [#allocation3], 1
    %72 = vsyncpa [#allocation6], 1
    %73 = vsyncpa [#allocation4], 1

</llo_original>
